<compile_context>
chip_gen: v5e
topology: v5e:2x2
jax: 0.10.0
libtpu: 0.0.40
codegen_flags: <defaults>
</compile_context>

<pallas_src>
import numpy as np
import jax
import jax.numpy as jnp
from jax.experimental import pallas as pl
from jax.experimental.pallas import tpu as pltpu

_LANE = 128
_TEMP_F32_FACTOR = 4  # VMEM allowance for f32 intermediates per unit of TS


def _vmem_config(budget_override):
    """Return (tile-sizing budget, vmem_limit_bytes) for this TPU generation."""
    try:
        cap = int(pltpu.get_tpu_info().vmem_capacity_bytes)
    except Exception:  # unknown backend / interpret mode -> conservative
        cap = 64 * 1024 * 1024
    if cap >= 96 * 1024 * 1024:          # v5e / v6e: 128 MiB VMEM
        budget, limit = 64 * 1024 * 1024, 96 * 1024 * 1024
    else:                                # v7x: 64 MiB VMEM per TensorCore
        budget, limit = 32 * 1024 * 1024, 52 * 1024 * 1024
    if budget_override is not None:
        budget = int(budget_override)
    return budget, limit


def _choose_spatial_tile(S, rows, itemsize, vmem_budget):
    """Pick the S tile length TS.

    Budget covers 2 inputs x 2 pipeline buffers in native dtype plus an
    allowance for f32 intermediates.  Prefers (a) a single exact tile when the
    whole row fits, then (b) a multiple of 128 that divides S exactly (so no
    in-kernel masking is needed), otherwise (c) the largest 128-aligned tile.
    """
    rows = max(rows, 8)  # sublane-granule padding of narrow blocks
    per_ts = rows * (2 * 2 * itemsize + _TEMP_F32_FACTOR * 4)
    max_ts = max(_LANE, (vmem_budget // per_ts) // _LANE * _LANE)
    if max_ts >= S:
        return S  # one exact tile: block dim == full array dim, no mask needed
    ts = max_ts
    if S % _LANE == 0:
        best = 0
        for d in range(_LANE, ts + 1, _LANE):
            if S % d == 0:
                best = d
        if best * 2 >= ts:  # accept an exact divisor if it costs <= 2x tile size
            ts = best
    return ts


def _make_sums_kernel(S, TS, Kt2, Ktot, needs_mask):
    """Grid: (row_blocks, split2, Kt2).  Blocks:
       p_ref/t_ref : (R, TS)   rows = flattened (sample, class), one S tile
       pt/pp/tt    : (R, 1)    per-row accumulators, VMEM-resident across k
    """

    def kernel(p_ref, t_ref, pt_ref, pp_ref, tt_ref):
        k = pl.program_id(2)

        @pl.when(k == 0)
        def _():
            pt_ref[...] = jnp.zeros_like(pt_ref)
            pp_ref[...] = jnp.zeros_like(pp_ref)
            tt_ref[...] = jnp.zeros_like(tt_ref)

        p = p_ref[...].astype(jnp.float32)   # (R, TS)
        t = t_ref[...].astype(jnp.float32)

        if needs_mask:
            # Global tile index along S for this step.  It may cover a partial
            # tail (S % TS != 0) or be a phantom tile of an odd 2-way split
            # (valid <= 0), in which case everything is masked to zero.
            g = pl.program_id(1) * Kt2 + k
            valid = S - g * TS
            lane = jax.lax.broadcasted_iota(jnp.int32, p.shape, 1)
            m = lane < valid
            p = jnp.where(m, p, 0.0)
            t = jnp.where(m, t, 0.0)

        pt_ref[...] += jnp.sum(p * t, axis=-1, keepdims=True)
        pp_ref[...] += jnp.sum(p * p, axis=-1, keepdims=True)
        tt_ref[...] += jnp.sum(t * t, axis=-1, keepdims=True)

    return kernel


def eldice_loss_pallas(pred, target, *, vmem_budget_bytes=None):
    """pred, target: (N, C, *spatial) arrays -> scalar loss (float32)."""
    assert pred.shape == target.shape and pred.ndim >= 3
    N, C = int(pred.shape[0]), int(pred.shape[1])
    S = int(np.prod(pred.shape[2:]))
    NC = N * C

    # Fold the class axis into rows; keep the native dtype in HBM.
    p2 = pred.reshape(NC, S)
    t2 = target.reshape(NC, S)

    itemsize = int(jnp.dtype(pred.dtype).itemsize)
    budget, vmem_limit = _vmem_config(vmem_budget_bytes)

    R = NC if NC < 8 else 8                 # rows per block (full sublane tile)
    TS = _choose_spatial_tile(S, R, itemsize, budget)
    Ktot = pl.cdiv(S, TS)                   # number of real S tiles
    nr = pl.cdiv(NC, R)                     # row blocks

    # 2-way split of the S reduction so both v7x TensorCores get work even at
    # batch size 1 (the split axis is "parallel"); harmless on 1-TC chips.
    C2 = 2 if Ktot >= 2 else 1
    Kt2 = pl.cdiv(Ktot, C2)
    has_phantom = C2 * Kt2 != Ktot          # odd Ktot -> one phantom tile
    needs_mask = has_phantom or (Ktot * TS != S)

    if has_phantom:
        # Clamp the phantom tile onto the last real tile (its contribution is
        # fully masked inside the kernel); avoids an out-of-range block index.
        in_map = lambda r, c2, k: (r, jnp.minimum(c2 * Kt2 + k, Ktot - 1))
    else:
        in_map = lambda r, c2, k: (r, c2 * Kt2 + k)
    out_map = lambda r, c2, k: (c2, r, 0)

    in_spec = pl.BlockSpec((R, TS), in_map)
    out_spec = pl.BlockSpec((None, R, 1), out_map)
    out_sds = jax.ShapeDtypeStruct((C2, NC, 1), jnp.float32)

    cost = pl.CostEstimate(
        flops=6 * NC * S,
        transcendentals=0,
        bytes_accessed=2 * NC * S * itemsize + 3 * C2 * NC * 4,
    )

    pt_s, pp_s, tt_s = pl.pallas_call(
        _make_sums_kernel(S, TS, Kt2, Ktot, needs_mask),
        out_shape=(out_sds, out_sds, out_sds),
        grid_spec=pltpu.PrefetchScalarGridSpec(
            num_scalar_prefetch=0,
            grid=(nr, C2, Kt2),
            in_specs=[in_spec, in_spec],
            out_specs=(out_spec, out_spec, out_spec),
        ),
        compiler_params=pltpu.CompilerParams(
            dimension_semantics=("parallel", "parallel", "arbitrary"),
            vmem_limit_bytes=vmem_limit,
        ),
        cost_estimate=cost,
    )(p2, t2)

    # Combine the 2-way split partial sums and un-fold rows -> (N, C).
    inter = pt_s.sum(axis=0)[:, 0].reshape(N, C)
    psq = pp_s.sum(axis=0)[:, 0].reshape(N, C)
    tsq = tt_s.sum(axis=0)[:, 0].reshape(N, C)

    smooth = 1.0
    dice = jnp.sum(2.0 * inter / (psq + tsq + smooth), axis=1) / C   # (N,)
    # NOTE: like the PyTorch reference, pow(-log(dice + 1e-5), 0.3) is NaN when
    # dice >= 1 (perfect overlap); semantics are kept identical on purpose.
    return jnp.clip(jnp.mean(jnp.power(-jnp.log(dice + 1e-5), 0.3)), 0.0, 2.0)


def eldice_loss_ref(pred, target):
    """Pure-JAX reference mirroring the PyTorch forward exactly."""
    smooth = 1.0
    C = pred.shape[1]
    axes = tuple(range(2, pred.ndim))
    p = pred.astype(jnp.float32)
    t = target.astype(jnp.float32)
    inter = jnp.sum(p * t, axis=axes)                  # (N, C)
    psq = jnp.sum(p * p, axis=axes)                    # (N, C)
    tsq = jnp.sum(t * t, axis=axes)                    # (N, C)
    dice = jnp.sum(2.0 * inter / (psq + tsq + smooth), axis=1) / C   # (N,)
    return jnp.clip(jnp.mean(jnp.power(-jnp.log(dice + 1e-5), 0.3)), 0.0, 2.0)


if __name__ == "__main__":
    key = jax.random.PRNGKey(0)

    def make_inputs(shape, k):
        k1, k2 = jax.random.split(k)
        pred = jax.random.uniform(k1, shape, dtype=jnp.float32)
        target = jnp.round(jax.random.uniform(k2, shape, dtype=jnp.float32))
        return pred, target

    # (shape, forced VMEM tile budget or None).  Small shapes, but they cover:
    # single-tile, multi-tile + 2-way split, partial last tile + phantom tile,
    # partial row block (NC % 8 != 0), and S < 128.
    cases = [
        ((2, 4, 8, 16, 16), None),         # NC=8, one S tile
        ((2, 4, 8, 16, 16), 128 * 1024),   # TS=512: 4 tiles, 2-way split, no mask
        ((2, 3, 5, 13, 16), 128 * 1024),   # S=1040: partial tail + phantom tile
        ((3, 4, 4, 8, 16), None),          # NC=12: partial row block
        ((1, 2, 3, 5, 7), None),           # S=105 < 128: single exact tile
    ]

    for shape, forced_budget in cases:
        key, sub = jax.random.split(key)
        pred, target = make_inputs(shape, sub)
        ref = jax.block_until_ready(eldice_loss_ref(pred, target))
        got = jax.block_until_ready(
            eldice_loss_pallas(pred, target, vmem_budget_bytes=forced_budget))
        np.testing.assert_allclose(np.asarray(got), np.asarray(ref),
                                   rtol=1e-4, atol=1e-5)

    print("KERNEL_OK")
</pallas_src>

<mosaic_0001>
module attributes {stable_mosaic.version = 11 : i64} {
  func.func @kernel(%arg0: i32, %arg1: i32, %arg2: i32, %arg3: memref<8x2048xf32, #tpu.memory_space<vmem>>, %arg4: memref<8x2048xf32, #tpu.memory_space<vmem>>, %arg5: memref<1x8x1xf32, #tpu.memory_space<vmem>>, %arg6: memref<1x8x1xf32, #tpu.memory_space<vmem>>, %arg7: memref<1x8x1xf32, #tpu.memory_space<vmem>>) attributes {dimension_semantics = [#tpu.dimension_semantics<parallel>, #tpu.dimension_semantics<parallel>, #tpu.dimension_semantics<arbitrary>], iteration_bounds = array<i64: 1, 1, 1>, scalar_prefetch = 0 : i64, scratch_operands = 0 : i64, tpu.core_type = #tpu.core_type<tc>, window_params = [{transform_indices = @transform_0, window_bounds = array<i64: 8, 2048>}, {transform_indices = @transform_1, window_bounds = array<i64: 8, 2048>}, {transform_indices = @transform_2, window_bounds = array<i64: 1, 8, 1>}, {transform_indices = @transform_3, window_bounds = array<i64: 1, 8, 1>}, {transform_indices = @transform_4, window_bounds = array<i64: 1, 8, 1>}]} {
    %c0_i32 = arith.constant 0 : i32
    %0 = arith.cmpi eq, %arg2, %c0_i32 : i32
    %1 = arith.extui %0 : i1 to i32
    %c0_i32_0 = arith.constant 0 : i32
    %2 = arith.cmpi ne, %1, %c0_i32_0 : i32
    scf.if %2 {
      %cst_24 = arith.constant 0.000000e+00 : f32
      %32 = vector.broadcast %cst_24 : f32 to vector<8x1xf32>
      %c0_25 = arith.constant 0 : index
      %c0_26 = arith.constant 0 : index
      %c0_27 = arith.constant 0 : index
      %33 = vector.load %arg5[%c0_25, %c0_26, %c0_27] : memref<1x8x1xf32, #tpu.memory_space<vmem>>, vector<1x8x1xf32>
      %34 = vector.shape_cast %33 : vector<1x8x1xf32> to vector<8x1xf32>
      %35 = vector.shape_cast %32 : vector<8x1xf32> to vector<1x8x1xf32>
      tpu.vector_store %arg5[%c0_25, %c0_26, %c0_27], %35 {strides = array<i32>} : memref<1x8x1xf32, #tpu.memory_space<vmem>>, vector<1x8x1xf32>,
      %cst_28 = arith.constant 0.000000e+00 : f32
      %36 = vector.broadcast %cst_28 : f32 to vector<8x1xf32>
      %c0_29 = arith.constant 0 : index
      %c0_30 = arith.constant 0 : index
      %c0_31 = arith.constant 0 : index
      %37 = vector.load %arg6[%c0_29, %c0_30, %c0_31] : memref<1x8x1xf32, #tpu.memory_space<vmem>>, vector<1x8x1xf32>
      %38 = vector.shape_cast %37 : vector<1x8x1xf32> to vector<8x1xf32>
      %39 = vector.shape_cast %36 : vector<8x1xf32> to vector<1x8x1xf32>
      tpu.vector_store %arg6[%c0_29, %c0_30, %c0_31], %39 {strides = array<i32>} : memref<1x8x1xf32, #tpu.memory_space<vmem>>, vector<1x8x1xf32>,
      %cst_32 = arith.constant 0.000000e+00 : f32
      %40 = vector.broadcast %cst_32 : f32 to vector<8x1xf32>
      %c0_33 = arith.constant 0 : index
      %c0_34 = arith.constant 0 : index
      %c0_35 = arith.constant 0 : index
      %41 = vector.load %arg7[%c0_33, %c0_34, %c0_35] : memref<1x8x1xf32, #tpu.memory_space<vmem>>, vector<1x8x1xf32>
      %42 = vector.shape_cast %41 : vector<1x8x1xf32> to vector<8x1xf32>
      %43 = vector.shape_cast %40 : vector<8x1xf32> to vector<1x8x1xf32>
      tpu.vector_store %arg7[%c0_33, %c0_34, %c0_35], %43 {strides = array<i32>} : memref<1x8x1xf32, #tpu.memory_space<vmem>>, vector<1x8x1xf32>,
    } else {
    }
    %c0 = arith.constant 0 : index
    %c0_1 = arith.constant 0 : index
    %3 = vector.load %arg3[%c0, %c0_1] : memref<8x2048xf32, #tpu.memory_space<vmem>>, vector<8x2048xf32>
    %c0_2 = arith.constant 0 : index
    %c0_3 = arith.constant 0 : index
    %4 = vector.load %arg4[%c0_2, %c0_3] : memref<8x2048xf32, #tpu.memory_space<vmem>>, vector<8x2048xf32>
    %c0_4 = arith.constant 0 : index
    %c0_5 = arith.constant 0 : index
    %c0_6 = arith.constant 0 : index
    %5 = vector.load %arg5[%c0_4, %c0_5, %c0_6] : memref<1x8x1xf32, #tpu.memory_space<vmem>>, vector<1x8x1xf32>
    %6 = vector.shape_cast %5 : vector<1x8x1xf32> to vector<8x1xf32>
    %7 = arith.mulf %3, %4 : vector<8x2048xf32>
    %cst = arith.constant dense<0.000000e+00> : vector<8xf32>
    %8 = vector.multi_reduction <add>, %7, %cst [1] : vector<8x2048xf32> to vector<8xf32>
    %9 = vector.shape_cast %8 : vector<8xf32> to vector<8x1xf32>
    %10 = arith.addf %6, %9 : vector<8x1xf32>
    %c0_7 = arith.constant 0 : index
    %c0_8 = arith.constant 0 : index
    %c0_9 = arith.constant 0 : index
    %11 = vector.load %arg5[%c0_7, %c0_8, %c0_9] : memref<1x8x1xf32, #tpu.memory_space<vmem>>, vector<1x8x1xf32>
    %12 = vector.shape_cast %11 : vector<1x8x1xf32> to vector<8x1xf32>
    %13 = vector.shape_cast %10 : vector<8x1xf32> to vector<1x8x1xf32>
    tpu.vector_store %arg5[%c0_7, %c0_8, %c0_9], %13 {strides = array<i32>} : memref<1x8x1xf32, #tpu.memory_space<vmem>>, vector<1x8x1xf32>,
    %c0_10 = arith.constant 0 : index
    %c0_11 = arith.constant 0 : index
    %c0_12 = arith.constant 0 : index
    %14 = vector.load %arg6[%c0_10, %c0_11, %c0_12] : memref<1x8x1xf32, #tpu.memory_space<vmem>>, vector<1x8x1xf32>
    %15 = vector.shape_cast %14 : vector<1x8x1xf32> to vector<8x1xf32>
    %16 = arith.mulf %3, %3 : vector<8x2048xf32>
    %cst_13 = arith.constant dense<0.000000e+00> : vector<8xf32>
    %17 = vector.multi_reduction <add>, %16, %cst_13 [1] : vector<8x2048xf32> to vector<8xf32>
    %18 = vector.shape_cast %17 : vector<8xf32> to vector<8x1xf32>
    %19 = arith.addf %15, %18 : vector<8x1xf32>
    %c0_14 = arith.constant 0 : index
    %c0_15 = arith.constant 0 : index
    %c0_16 = arith.constant 0 : index
    %20 = vector.load %arg6[%c0_14, %c0_15, %c0_16] : memref<1x8x1xf32, #tpu.memory_space<vmem>>, vector<1x8x1xf32>
    %21 = vector.shape_cast %20 : vector<1x8x1xf32> to vector<8x1xf32>
    %22 = vector.shape_cast %19 : vector<8x1xf32> to vector<1x8x1xf32>
    tpu.vector_store %arg6[%c0_14, %c0_15, %c0_16], %22 {strides = array<i32>} : memref<1x8x1xf32, #tpu.memory_space<vmem>>, vector<1x8x1xf32>,
    %c0_17 = arith.constant 0 : index
    %c0_18 = arith.constant 0 : index
    %c0_19 = arith.constant 0 : index
    %23 = vector.load %arg7[%c0_17, %c0_18, %c0_19] : memref<1x8x1xf32, #tpu.memory_space<vmem>>, vector<1x8x1xf32>
    %24 = vector.shape_cast %23 : vector<1x8x1xf32> to vector<8x1xf32>
    %25 = arith.mulf %4, %4 : vector<8x2048xf32>
    %cst_20 = arith.constant dense<0.000000e+00> : vector<8xf32>
    %26 = vector.multi_reduction <add>, %25, %cst_20 [1] : vector<8x2048xf32> to vector<8xf32>
    %27 = vector.shape_cast %26 : vector<8xf32> to vector<8x1xf32>
    %28 = arith.addf %24, %27 : vector<8x1xf32>
    %c0_21 = arith.constant 0 : index
    %c0_22 = arith.constant 0 : index
    %c0_23 = arith.constant 0 : index
    %29 = vector.load %arg7[%c0_21, %c0_22, %c0_23] : memref<1x8x1xf32, #tpu.memory_space<vmem>>, vector<1x8x1xf32>
    %30 = vector.shape_cast %29 : vector<1x8x1xf32> to vector<8x1xf32>
    %31 = vector.shape_cast %28 : vector<8x1xf32> to vector<1x8x1xf32>
    tpu.vector_store %arg7[%c0_21, %c0_22, %c0_23], %31 {strides = array<i32>} : memref<1x8x1xf32, #tpu.memory_space<vmem>>, vector<1x8x1xf32>,
    return
  }
  func.func @transform_0(%arg0: i32, %arg1: i32, %arg2: i32) -> (i32, i32) {
    %c1_i32 = arith.constant 1 : i32
    %0 = arith.muli %arg1, %c1_i32 : i32
    %1 = arith.addi %0, %arg2 : i32
    %c0_i32 = arith.constant 0 : i32
    return %arg0, %1 : i32, i32
  }
  func.func @transform_1(%arg0: i32, %arg1: i32, %arg2: i32) -> (i32, i32) {
    %c1_i32 = arith.constant 1 : i32
    %0 = arith.muli %arg1, %c1_i32 : i32
    %1 = arith.addi %0, %arg2 : i32
    %c0_i32 = arith.constant 0 : i32
    return %arg0, %1 : i32, i32
  }
  func.func @transform_2(%arg0: i32, %arg1: i32, %arg2: i32) -> (i32, i32, i32) {
    %c0_i32 = arith.constant 0 : i32
    %c0_i32_0 = arith.constant 0 : i32
    return %arg1, %arg0, %c0_i32 : i32, i32, i32
  }
  func.func @transform_3(%arg0: i32, %arg1: i32, %arg2: i32) -> (i32, i32, i32) {
    %c0_i32 = arith.constant 0 : i32
    %c0_i32_0 = arith.constant 0 : i32
    return %arg1, %arg0, %c0_i32 : i32, i32, i32
  }
  func.func @transform_4(%arg0: i32, %arg1: i32, %arg2: i32) -> (i32, i32, i32) {
    %c0_i32 = arith.constant 0 : i32
    %c0_i32_0 = arith.constant 0 : i32
    return %arg1, %arg0, %c0_i32 : i32, i32, i32
  }
}

</mosaic_0001>

<llo_original>
// kernel: tpu_custom_call.1
$region0: #{tpu_custom_call.1}
  #allocation0 [shape = 'u32[]', space=smem, size = 0x4, offset = 0x4, fixed_abs, tag = 'smem constant byte address 0x4 - core index']
  #allocation1 [shape = 'u32[72,128]{1,0:T(1,128)}', space=vmem, size = 0x9000, scoped, tag = 'internal scratch']
  %s0 = inlined_call_operand.hbm [shape: f32[8,2048], index: 0, kind: input, shape index: {}]
  %s1 = inlined_call_operand.hbm [shape: f32[8,2048], index: 1, kind: input, shape index: {}]
  %s2 = inlined_call_operand.vmem [shape: f32[1,8,1], index: 2, kind: output, shape index: {0}]
  %s3 = inlined_call_operand.vmem [shape: f32[1,8,1], index: 3, kind: output, shape index: {1}]
  %s4 = inlined_call_operand.vmem [shape: f32[1,8,1], index: 4, kind: output, shape index: {2}]
  %5 = xla_tuple %s2, %s3, %s4
  %s6 = sld [smem:[#allocation0]]
  $region46: #{tpu_custom_call.1} parent=0
    _
  %s8 = ssub.s32 1, %s6
  %s9 = scalar_select 0, %s8, %s6
  $region1: #{tpu_custom_call.1} parent=0
    #allocation2 [shape = 'u8[65536]{0}', space=vmem, size = 0x10000, scoped, tag = 'input window, operand 0, single buffered']
    #allocation3 [shape = 's32[1]{0}', space=sflag, size = 0x4, scoped, tag = 'scoped memory for tpu_custom_call.1']
    #allocation4 [shape = 'u8[65536]{0}', space=vmem, size = 0x10000, scoped, tag = 'input window, operand 1, single buffered']
    #allocation5 [shape = 's32[1]{0}', space=sflag, size = 0x4, scoped, tag = 'scoped memory for tpu_custom_call.1']
    %10 = vsyncpa [#allocation3], 0
    %11 = vsyncpa [#allocation5], 0
    // Predicated region
    $region2: #{tpu_custom_call.1} parent=1 // pred_check
      _
    $region3: #{tpu_custom_call.1} parent=1 // pred_check_branch
      %13 = sbr.rel (0) target = $region5
    $region4: #{tpu_custom_call.1} parent=1 // pred_region
      %s14 = sadd.s32 0, 0
      %s15 = smul.u32 16, %s14
      %17 = vsyncadd [#allocation3], 0
      %s18 = smul.addr %s15, 8
      %s19 = scalar_lea.hbm %s0, %s18
      %s21 = sshll.u32 %s19, 4
      %s22 = int_to_ptr.hbm [resolvable:$true] %s21
      %s23 = sshll.u32 [#allocation2], 4
      %s24 = int_to_ptr.vmem [resolvable:$true] %s23
      %26 = dma.hbm_to_vmem [thread:$0]  %s22, 2048, %s24, [#allocation3]
    $region5: #{tpu_custom_call.1} parent=1 // pred_fallthru
      _
    // Predicated region
    $region6: #{tpu_custom_call.1} parent=1 // pred_check
      _
    $region7: #{tpu_custom_call.1} parent=1 // pred_check_branch
      %28 = sbr.rel (0) target = $region9
    $region8: #{tpu_custom_call.1} parent=1 // pred_region
      %s29 = sadd.s32 0, 0
      %s30 = smul.u32 16, %s29
      %32 = vsyncadd [#allocation5], 0
      %s33 = smul.addr %s30, 8
      %s34 = scalar_lea.hbm %s1, %s33
      %s36 = sshll.u32 %s34, 4
      %s37 = int_to_ptr.hbm [resolvable:$true] %s36
      %s38 = sshll.u32 [#allocation4], 4
      %s39 = int_to_ptr.vmem [resolvable:$true] %s38
      %41 = dma.hbm_to_vmem [thread:$0]  %s37, 2048, %s39, [#allocation5]
    $region9: #{tpu_custom_call.1} parent=1 // pred_fallthru
      _
    // Predicated region
    $region10: #{tpu_custom_call.1} parent=1 // pred_check
      _
    $region11: #{tpu_custom_call.1} parent=1 // pred_check_branch
      %43 = sbr.rel (0) target = $region13
    $region12: #{tpu_custom_call.1} parent=1 // pred_region
      %45 = dma.done [#allocation3], 2048
    $region13: #{tpu_custom_call.1} parent=1 // pred_fallthru
      _
    // Predicated region
    $region14: #{tpu_custom_call.1} parent=1 // pred_check
      _
    $region15: #{tpu_custom_call.1} parent=1 // pred_check_branch
      %47 = sbr.rel (0) target = $region17
    $region16: #{tpu_custom_call.1} parent=1 // pred_region
      %49 = dma.done [#allocation5], 2048
    $region17: #{tpu_custom_call.1} parent=1 // pred_fallthru
      _
    %s50 = sadd.s32 0, 0
    %s51 = smul.u32 16, %s50
    %s52 = sadd.s32 0, 0
    %s53 = smul.u32 16, %s52
    %p54 = scmp.eq.s32.totalorder 0, 0
    // Predicated region
    $region18: #{tpu_custom_call.1} parent=1 // pred_check
      %p55 = pneg %p54
    $region19: #{tpu_custom_call.1} parent=1 // pred_check_branch
      %57 = sbr.rel (%p55) target = $region21
    $region20: #{tpu_custom_call.1} parent=1 // pred_region
      %vm58 = vcmask 7168
      %59 = vst.msk [vmem:[%s2] sm:$0xff] %vm58, 0.0
      %60 = vst.msk [vmem:[%s3] sm:$0xff] %vm58, 0.0
      %61 = vst.msk [vmem:[%s4] sm:$0xff] %vm58, 0.0
    $region21: #{tpu_custom_call.1} parent=1 // pred_fallthru
      _
    %v62 = vld [vmem:[#allocation2] sm:$0xff]
    %v63 = vld [vmem:[#allocation2 + $0x8] sm:$0xff]
    %v64 = vld [vmem:[#allocation2 + $0x10] sm:$0xff]
    %v65 = vld [vmem:[#allocation2 + $0x18] sm:$0xff]
    %v66 = vld [vmem:[#allocation2 + $0x20] sm:$0xff]
    %v67 = vld [vmem:[#allocation2 + $0x28] sm:$0xff]
    %v68 = vld [vmem:[#allocation2 + $0x30] sm:$0xff]
    %v69 = vld [vmem:[#allocation2 + $0x38] sm:$0xff]
    %v70 = vld [vmem:[#allocation2 + $0x40] sm:$0xff]
    %v71 = vld [vmem:[#allocation2 + $0x48] sm:$0xff]
    %v72 = vld [vmem:[#allocation2 + $0x50] sm:$0xff]
    %v73 = vld [vmem:[#allocation2 + $0x58] sm:$0xff]
    %v74 = vld [vmem:[#allocation2 + $0x60] sm:$0xff]
    %v75 = vld [vmem:[#allocation2 + $0x68] sm:$0xff]
    %v76 = vld [vmem:[#allocation2 + $0x70] sm:$0xff]
    %v77 = vld [vmem:[#allocation2 + $0x78] sm:$0xff]
    %v78 = vld [vmem:[#allocation4] sm:$0xff]
    %v79 = vld [vmem:[#allocation4 + $0x8] sm:$0xff]
    %v80 = vld [vmem:[#allocation4 + $0x10] sm:$0xff]
    %v81 = vld [vmem:[#allocation4 + $0x18] sm:$0xff]
    %v82 = vld [vmem:[#allocation4 + $0x20] sm:$0xff]
    %v83 = vld [vmem:[#allocation4 + $0x28] sm:$0xff]
    %v84 = vld [vmem:[#allocation4 + $0x30] sm:$0xff]
    %v85 = vld [vmem:[#allocation4 + $0x38] sm:$0xff]
    %v86 = vld [vmem:[#allocation4 + $0x40] sm:$0xff]
    %v87 = vld [vmem:[#allocation4 + $0x48] sm:$0xff]
    %v88 = vld [vmem:[#allocation4 + $0x50] sm:$0xff]
    %v89 = vld [vmem:[#allocation4 + $0x58] sm:$0xff]
    %v90 = vld [vmem:[#allocation4 + $0x60] sm:$0xff]
    %v91 = vld [vmem:[#allocation4 + $0x68] sm:$0xff]
    %v92 = vld [vmem:[#allocation4 + $0x70] sm:$0xff]
    %v93 = vld [vmem:[#allocation4 + $0x78] sm:$0xff]
    %v94 = vld [vmem:[%s2] sm:$0xff]
    %v95 = vmul.f32 %v62, %v78
    %v96 = vmul.f32 %v63, %v79
    %v97 = vmul.f32 %v64, %v80
    %v98 = vmul.f32 %v65, %v81
    %v99 = vmul.f32 %v66, %v82
    %v100 = vmul.f32 %v67, %v83
    %v101 = vmul.f32 %v68, %v84
    %v102 = vmul.f32 %v69, %v85
    %v103 = vmul.f32 %v70, %v86
    %v104 = vmul.f32 %v71, %v87
    %v105 = vmul.f32 %v72, %v88
    %v106 = vmul.f32 %v73, %v89
    %v107 = vmul.f32 %v74, %v90
    %v108 = vmul.f32 %v75, %v91
    %v109 = vmul.f32 %v76, %v92
    %v110 = vmul.f32 %v77, %v93
    %v111 = vadd.f32 %v95, %v96
    %v112 = vadd.f32 %v111, %v97
    %v113 = vadd.f32 %v112, %v98
    %v114 = vadd.f32 %v113, %v99
    %v115 = vadd.f32 %v114, %v100
    %v116 = vadd.f32 %v115, %v101
    %v117 = vadd.f32 %v116, %v102
    %v118 = vadd.f32 %v117, %v103
    %v119 = vadd.f32 %v118, %v104
    %v120 = vadd.f32 %v119, %v105
    %v121 = vadd.f32 %v120, %v106
    %v122 = vadd.f32 %v121, %v107
    %v123 = vadd.f32 %v122, %v108
    %v124 = vadd.f32 %v123, %v109
    %v125 = vadd.f32 %v124, %v110
    %126 = vadd.xlane.f32.xlu0 %v125
    %v127 = vpop.xlane.xlu0 %126
    %v128 = vadd.f32 %v94, %v127
    %vm129 = vcmask 7168
    %130 = vst.msk [vmem:[%s2] sm:$0xff] %vm129, %v128
    %v131 = vld [vmem:[%s3] sm:$0xff]
    %v132 = vmul.f32 %v62, %v62
    %v133 = vmul.f32 %v63, %v63
    %v134 = vmul.f32 %v64, %v64
    %v135 = vmul.f32 %v65, %v65
    %v136 = vmul.f32 %v66, %v66
    %v137 = vmul.f32 %v67, %v67
    %v138 = vmul.f32 %v68, %v68
    %v139 = vmul.f32 %v69, %v69
    %v140 = vmul.f32 %v70, %v70
    %v141 = vmul.f32 %v71, %v71
    %v142 = vmul.f32 %v72, %v72
    %v143 = vmul.f32 %v73, %v73
    %v144 = vmul.f32 %v74, %v74
    %v145 = vmul.f32 %v75, %v75
    %v146 = vmul.f32 %v76, %v76
    %v147 = vmul.f32 %v77, %v77
    %v148 = vadd.f32 %v132, %v133
    %v149 = vadd.f32 %v148, %v134
    %v150 = vadd.f32 %v149, %v135
    %v151 = vadd.f32 %v150, %v136
    %v152 = vadd.f32 %v151, %v137
    %v153 = vadd.f32 %v152, %v138
    %v154 = vadd.f32 %v153, %v139
    %v155 = vadd.f32 %v154, %v140
    %v156 = vadd.f32 %v155, %v141
    %v157 = vadd.f32 %v156, %v142
    %v158 = vadd.f32 %v157, %v143
    %v159 = vadd.f32 %v158, %v144
    %v160 = vadd.f32 %v159, %v145
    %v161 = vadd.f32 %v160, %v146
    %v162 = vadd.f32 %v161, %v147
    %163 = vadd.xlane.f32.xlu0 %v162
    %v164 = vpop.xlane.xlu0 %163
    %v165 = vadd.f32 %v131, %v164
    %166 = vst.msk [vmem:[%s3] sm:$0xff] %vm129, %v165
    %v167 = vld [vmem:[%s4] sm:$0xff]
    %v168 = vmul.f32 %v78, %v78
    %v169 = vmul.f32 %v79, %v79
    %v170 = vmul.f32 %v80, %v80
    %v171 = vmul.f32 %v81, %v81
    %v172 = vmul.f32 %v82, %v82
    %v173 = vmul.f32 %v83, %v83
    %v174 = vmul.f32 %v84, %v84
    %v175 = vmul.f32 %v85, %v85
    %v176 = vmul.f32 %v86, %v86
    %v177 = vmul.f32 %v87, %v87
    %v178 = vmul.f32 %v88, %v88
    %v179 = vmul.f32 %v89, %v89
    %v180 = vmul.f32 %v90, %v90
    %v181 = vmul.f32 %v91, %v91
    %v182 = vmul.f32 %v92, %v92
    %v183 = vmul.f32 %v93, %v93
    %v184 = vadd.f32 %v168, %v169
    %v185 = vadd.f32 %v184, %v170
    %v186 = vadd.f32 %v185, %v171
    %v187 = vadd.f32 %v186, %v172
    %v188 = vadd.f32 %v187, %v173
    %v189 = vadd.f32 %v188, %v174
    %v190 = vadd.f32 %v189, %v175
    %v191 = vadd.f32 %v190, %v176
    %v192 = vadd.f32 %v191, %v177
    %v193 = vadd.f32 %v192, %v178
    %v194 = vadd.f32 %v193, %v179
    %v195 = vadd.f32 %v194, %v180
    %v196 = vadd.f32 %v195, %v181
    %v197 = vadd.f32 %v196, %v182
    %v198 = vadd.f32 %v197, %v183
    %199 = vadd.xlane.f32.xlu0 %v198
    %v200 = vpop.xlane.xlu0 %199
    %v201 = vadd.f32 %v167, %v200
    %202 = vst.msk [vmem:[%s4] sm:$0xff] %vm129, %v201
    // Predicated region
    $region22: #{tpu_custom_call.1} parent=1 // pred_check
      _
    $region23: #{tpu_custom_call.1} parent=1 // pred_check_branch
      %204 = sbr.rel (0) target = $region25
    $region24: #{tpu_custom_call.1} parent=1 // pred_region
      _
    $region25: #{tpu_custom_call.1} parent=1 // pred_fallthru
      _
    // Predicated region
    $region26: #{tpu_custom_call.1} parent=1 // pred_check
      _
    $region27: #{tpu_custom_call.1} parent=1 // pred_check_branch
      %206 = sbr.rel (0) target = $region29
    $region28: #{tpu_custom_call.1} parent=1 // pred_region
      _
    $region29: #{tpu_custom_call.1} parent=1 // pred_fallthru
      _
    // Predicated region
    $region30: #{tpu_custom_call.1} parent=1 // pred_check
      _
    $region31: #{tpu_custom_call.1} parent=1 // pred_check_branch
      %208 = sbr.rel (0) target = $region33
    $region32: #{tpu_custom_call.1} parent=1 // pred_region
      _
    $region33: #{tpu_custom_call.1} parent=1 // pred_fallthru
      _
    // Predicated region
    $region34: #{tpu_custom_call.1} parent=1 // pred_check
      _
    $region35: #{tpu_custom_call.1} parent=1 // pred_check_branch
      %210 = sbr.rel (0) target = $region37
    $region36: #{tpu_custom_call.1} parent=1 // pred_region
      _
    $region37: #{tpu_custom_call.1} parent=1 // pred_fallthru
      _
    // Predicated region
    $region38: #{tpu_custom_call.1} parent=1 // pred_check
      _
    $region39: #{tpu_custom_call.1} parent=1 // pred_check_branch
      %212 = sbr.rel (0) target = $region41
    $region40: #{tpu_custom_call.1} parent=1 // pred_region
      _
    $region41: #{tpu_custom_call.1} parent=1 // pred_fallthru
      _
    // Predicated region
    $region42: #{tpu_custom_call.1} parent=1 // pred_check
      _
    $region43: #{tpu_custom_call.1} parent=1 // pred_check_branch
      %214 = sbr.rel (0) target = $region45
    $region44: #{tpu_custom_call.1} parent=1 // pred_region
      _
    $region45: #{tpu_custom_call.1} parent=1 // pred_fallthru
      _
    %215 = vsyncpa [#allocation3], 1
    %216 = vsyncpa [#allocation5], 1

</llo_original>
